<compile_context>
chip_gen: v6e
topology: v6e:2x2x1
jax: 0.10.0
libtpu: 0.0.40
codegen_flags: <defaults>
</compile_context>

<pallas_src>
import functools

import jax
import jax.numpy as jnp
from jax.experimental import pallas as pl
from jax.experimental.pallas import tpu as pltpu

HIDDEN = 350
HIDDEN_PAD = 384          # next multiple of 128
OUT_PAD = 128             # MXU-friendly width for the last layer; col 0 is real
ONES_COL = HIDDEN_PAD - 1  # padded channel used to carry the folded biases
DEFAULT_TILE_B = 2048     # batch tile; ~13 MiB VMEM at tb=2048 (fits all chips)
MIN_SPLIT_BATCH = 256     # force >=2 parallel tiles above this (v7x has 2 TCs)


def _round_up(x, m):
    return ((x + m - 1) // m) * m


def _cdiv(a, b):
    return (a + b - 1) // b


def _critic_kernel(x_ref, w1_ref, b1_ref, w2_ref, w3_ref, o_ref):
    # x tile: (tb, in_dim) f32 -> bf16 for the MXU; accumulate in f32.
    x = x_ref[...].astype(jnp.bfloat16)
    h1 = jnp.dot(x, w1_ref[...], preferred_element_type=jnp.float32) + b1_ref[...]
    h1 = jnp.maximum(h1, 0.0).astype(jnp.bfloat16)        # col 383 stays exactly 1
    # b2 is folded into w2 row 383 (ones-channel): no bias add needed.
    h2 = jnp.dot(h1, w2_ref[...], preferred_element_type=jnp.float32)
    h2 = jnp.maximum(h2, 0.0).astype(jnp.bfloat16)        # col 383 stays exactly 1
    # b3 is folded into w3 row 383; only output column 0 is meaningful.
    res = jnp.dot(h2, w3_ref[...], preferred_element_type=jnp.float32)
    o_ref[...] = res[:, :1]                                # (tb, 1) store, 4 B/row


def pack_params(params):
    """One-time conversion to the kernel's stored parameter format.

    Weights -> bf16, (in, out) layout, hidden padded 350->384, last layer
    padded to 128 output columns.  b2/b3 are folded into the padded
    ones-channel (column 383); only b1 remains an explicit (f32) bias.
    Do this at init / parameter-update time, NOT per forward call.
    """
    w1, b1, w2, b2, w3, b3 = params
    in_dim = w1.shape[0]

    w1p = jnp.zeros((in_dim, HIDDEN_PAD), jnp.bfloat16)
    w1p = w1p.at[:, :HIDDEN].set(w1.astype(jnp.bfloat16))

    b1p = jnp.zeros((1, HIDDEN_PAD), jnp.float32)
    b1p = b1p.at[0, :HIDDEN].set(b1.astype(jnp.float32))
    b1p = b1p.at[0, ONES_COL].set(1.0)                    # h1[:, 383] == 1

    w2p = jnp.zeros((HIDDEN_PAD, HIDDEN_PAD), jnp.bfloat16)
    w2p = w2p.at[:HIDDEN, :HIDDEN].set(w2.astype(jnp.bfloat16))
    w2p = w2p.at[ONES_COL, :HIDDEN].set(b2.astype(jnp.bfloat16))   # folded b2
    w2p = w2p.at[ONES_COL, ONES_COL].set(jnp.asarray(1.0, jnp.bfloat16))

    w3p = jnp.zeros((HIDDEN_PAD, OUT_PAD), jnp.bfloat16)
    w3p = w3p.at[:HIDDEN, 0].set(w3[:, 0].astype(jnp.bfloat16))
    w3p = w3p.at[ONES_COL, 0].set(b3.astype(jnp.bfloat16)[0])      # folded b3

    return (w1p, b1p, w2p, w3p)


def _select_tiles(batch, tile_b):
    """Balanced batch tiling: smallest tile count with tb <= tile_b, tb % 8 == 0,
    and >= 2 tiles for medium/large batches so both v7x TensorCores work."""
    tile_b = max(8, _round_up(min(tile_b, max(batch, 8)), 8))
    n_tiles = _cdiv(batch, tile_b)
    if n_tiles == 1 and batch >= MIN_SPLIT_BATCH:
        n_tiles = 2
    tb = _round_up(_cdiv(batch, n_tiles), 8)
    n_tiles = _cdiv(batch, tb)
    return tb, n_tiles


@functools.partial(jax.jit, static_argnames=("tile_b",))
def critic_forward(state, packed_params, tile_b=DEFAULT_TILE_B):
    """state: (B, in_dim) float32. packed_params: output of pack_params().
    Returns (B, 1) float32."""
    w1p, b1p, w2p, w3p = packed_params
    batch, in_dim = state.shape
    state = state.astype(jnp.float32)

    tb, n_tiles = _select_tiles(batch, tile_b)
    b_pad = n_tiles * tb
    if b_pad != batch:
        state = jnp.pad(state, ((0, b_pad - batch), (0, 0)))

    flops = 2 * b_pad * (in_dim * HIDDEN_PAD
                         + HIDDEN_PAD * HIDDEN_PAD
                         + HIDDEN_PAD * OUT_PAD)
    bytes_accessed = (b_pad * in_dim * 4 + b_pad * 4
                      + (w1p.size + w2p.size + w3p.size) * 2
                      + b1p.size * 4)

    out = pl.pallas_call(
        _critic_kernel,
        out_shape=jax.ShapeDtypeStruct((b_pad, 1), jnp.float32),
        grid_spec=pltpu.PrefetchScalarGridSpec(
            num_scalar_prefetch=0,
            grid=(n_tiles,),
            in_specs=[
                # state: tiled over batch, double-buffered by the pipeline
                pl.BlockSpec((tb, in_dim), lambda i: (i, 0)),
                # weights / bias: constant index_map -> VMEM-resident
                pl.BlockSpec((in_dim, HIDDEN_PAD), lambda i: (0, 0)),
                pl.BlockSpec((1, HIDDEN_PAD), lambda i: (0, 0)),
                pl.BlockSpec((HIDDEN_PAD, HIDDEN_PAD), lambda i: (0, 0)),
                pl.BlockSpec((HIDDEN_PAD, OUT_PAD), lambda i: (0, 0)),
            ],
            out_specs=pl.BlockSpec((tb, 1), lambda i: (i, 0)),
        ),
        compiler_params=pltpu.CompilerParams(
            dimension_semantics=("parallel",),
            vmem_limit_bytes=32 * 1024 * 1024),
        cost_estimate=pl.CostEstimate(
            flops=flops, transcendentals=0, bytes_accessed=bytes_accessed),
    )(state, w1p, b1p, w2p, w3p)

    return out[:batch]


def init_params(key, in_dim):
    ks = jax.random.split(key, 6)
    scale = 0.1
    w1 = scale * jax.random.normal(ks[0], (in_dim, HIDDEN), jnp.float32)
    b1 = scale * jax.random.normal(ks[1], (HIDDEN,), jnp.float32)
    w2 = scale * jax.random.normal(ks[2], (HIDDEN, HIDDEN), jnp.float32)
    b2 = scale * jax.random.normal(ks[3], (HIDDEN,), jnp.float32)
    w3 = scale * jax.random.normal(ks[4], (HIDDEN, 1), jnp.float32)
    b3 = scale * jax.random.normal(ks[5], (1,), jnp.float32)
    return (w1, b1, w2, b2, w3, b3)


def critic_reference_f32(state, params):
    """Pure-f32 reference: the PyTorch module's math."""
    w1, b1, w2, b2, w3, b3 = params
    x = jnp.maximum(state @ w1 + b1, 0.0)
    x = jnp.maximum(x @ w2 + b2, 0.0)
    return x @ w3 + b3


def critic_reference_packed(state, packed):
    """Reference mimicking the kernel's bf16/padded/bias-folded arithmetic."""
    w1p, b1p, w2p, w3p = packed
    x = state.astype(jnp.bfloat16)
    h1 = jnp.maximum(jnp.dot(x, w1p, preferred_element_type=jnp.float32) + b1p, 0.0)
    h2 = jnp.maximum(jnp.dot(h1.astype(jnp.bfloat16), w2p,
                             preferred_element_type=jnp.float32), 0.0)
    out = jnp.dot(h2.astype(jnp.bfloat16), w3p,
                  preferred_element_type=jnp.float32)
    return out[:, :1]


if __name__ == "__main__":
    key = jax.random.PRNGKey(0)
    k_state, k_params, k_state2 = jax.random.split(key, 3)

    batch, in_dim = 8, 32
    state = jax.random.normal(k_state, (batch, in_dim), jnp.float32)
    params = init_params(k_params, in_dim)
    packed = pack_params(params)   # done once; stored parameter format

    value = jax.block_until_ready(critic_forward(state, packed))
    assert value.shape == (batch, 1), value.shape

    # Tight check vs a reference using the same bf16/padded/bias-folded math.
    ref_exact = critic_reference_packed(state, packed)
    assert jnp.allclose(value, ref_exact, atol=2e-3, rtol=2e-3), \
        "mismatch vs bf16 packed reference"

    # Loose check vs the f32 PyTorch-spec math (bf16 rounding only).
    ref_f32 = critic_reference_f32(state, params)
    assert jnp.allclose(value, ref_f32, atol=5e-2, rtol=5e-2), \
        "mismatch vs f32 reference"

    # Exercise the multi-tile parallel grid + padded/balanced batch path.
    batch2 = 300
    state2 = jax.random.normal(k_state2, (batch2, in_dim), jnp.float32)
    value2 = jax.block_until_ready(critic_forward(state2, packed))
    assert value2.shape == (batch2, 1), value2.shape
    ref2 = critic_reference_packed(state2, packed)
    assert jnp.allclose(value2, ref2, atol=2e-3, rtol=2e-3), \
        "mismatch vs bf16 packed reference (multi-tile)"

    print("KERNEL_OK")
</pallas_src>

<mosaic_0001>
module attributes {stable_mosaic.version = 11 : i64} {
  func.func @_critic_kernel(%arg0: i32, %arg1: memref<8x32xf32, #tpu.memory_space<vmem>>, %arg2: memref<32x384xbf16, #tpu.memory_space<vmem>>, %arg3: memref<1x384xf32, #tpu.memory_space<vmem>>, %arg4: memref<384x384xbf16, #tpu.memory_space<vmem>>, %arg5: memref<384x128xbf16, #tpu.memory_space<vmem>>, %arg6: memref<8x1xf32, #tpu.memory_space<vmem>>) attributes {dimension_semantics = [#tpu.dimension_semantics<parallel>], iteration_bounds = array<i64: 1>, scalar_prefetch = 0 : i64, scratch_operands = 0 : i64, tpu.core_type = #tpu.core_type<tc>, window_params = [{transform_indices = @transform_0, window_bounds = array<i64: 8, 32>}, {pipeline_mode = #tpu.pipeline_mode<synchronous>, transform_indices = @transform_1, window_bounds = array<i64: 32, 384>}, {pipeline_mode = #tpu.pipeline_mode<synchronous>, transform_indices = @transform_2, window_bounds = array<i64: 1, 384>}, {pipeline_mode = #tpu.pipeline_mode<synchronous>, transform_indices = @transform_3, window_bounds = array<i64: 384, 384>}, {pipeline_mode = #tpu.pipeline_mode<synchronous>, transform_indices = @transform_4, window_bounds = array<i64: 384, 128>}, {transform_indices = @transform_5, window_bounds = array<i64: 8, 1>}]} {
    %c0 = arith.constant 0 : index
    %c0_0 = arith.constant 0 : index
    %0 = vector.load %arg1[%c0, %c0_0] : memref<8x32xf32, #tpu.memory_space<vmem>>, vector<8x32xf32>
    %1 = arith.truncf %0 : vector<8x32xf32> to vector<8x32xbf16>
    %c0_1 = arith.constant 0 : index
    %c0_2 = arith.constant 0 : index
    %2 = vector.load %arg2[%c0_1, %c0_2] : memref<32x384xbf16, #tpu.memory_space<vmem>>, vector<32x384xbf16>
    %cst = arith.constant dense<0.000000e+00> : vector<8x384xf32>
    %3 = tpu.matmul %1, %2, %cst {dimension_numbers = #tpu.dot_dimension_numbers<[1], [0], [0], [1], [0, 0, 1, 1], [], []>} : vector<8x32xbf16>, vector<32x384xbf16>, vector<8x384xf32> -> vector<8x384xf32>
    %c0_3 = arith.constant 0 : index
    %c0_4 = arith.constant 0 : index
    %4 = vector.load %arg3[%c0_3, %c0_4] : memref<1x384xf32, #tpu.memory_space<vmem>>, vector<1x384xf32>
    %5 = vector.broadcast %4 : vector<1x384xf32> to vector<8x384xf32>
    %6 = arith.addf %3, %5 : vector<8x384xf32>
    %cst_5 = arith.constant 0.000000e+00 : f32
    %7 = vector.broadcast %cst_5 : f32 to vector<8x384xf32>
    %8 = arith.maximumf %6, %7 : vector<8x384xf32>
    %9 = arith.truncf %8 : vector<8x384xf32> to vector<8x384xbf16>
    %c0_6 = arith.constant 0 : index
    %c0_7 = arith.constant 0 : index
    %10 = vector.load %arg4[%c0_6, %c0_7] : memref<384x384xbf16, #tpu.memory_space<vmem>>, vector<384x384xbf16>
    %cst_8 = arith.constant dense<0.000000e+00> : vector<8x384xf32>
    %11 = tpu.matmul %9, %10, %cst_8 {dimension_numbers = #tpu.dot_dimension_numbers<[1], [0], [0], [1], [0, 0, 1, 1], [], []>} : vector<8x384xbf16>, vector<384x384xbf16>, vector<8x384xf32> -> vector<8x384xf32>
    %cst_9 = arith.constant 0.000000e+00 : f32
    %12 = vector.broadcast %cst_9 : f32 to vector<8x384xf32>
    %13 = arith.maximumf %11, %12 : vector<8x384xf32>
    %14 = arith.truncf %13 : vector<8x384xf32> to vector<8x384xbf16>
    %c0_10 = arith.constant 0 : index
    %c0_11 = arith.constant 0 : index
    %15 = vector.load %arg5[%c0_10, %c0_11] : memref<384x128xbf16, #tpu.memory_space<vmem>>, vector<384x128xbf16>
    %cst_12 = arith.constant dense<0.000000e+00> : vector<8x128xf32>
    %16 = tpu.matmul %14, %15, %cst_12 {dimension_numbers = #tpu.dot_dimension_numbers<[1], [0], [0], [1], [0, 0, 1, 1], [], []>} : vector<8x384xbf16>, vector<384x128xbf16>, vector<8x128xf32> -> vector<8x128xf32>
    %17 = vector.extract_strided_slice %16 {offsets = [0, 0], sizes = [8, 1], strides = [1, 1]} : vector<8x128xf32> to vector<8x1xf32>
    %c0_13 = arith.constant 0 : index
    %c0_14 = arith.constant 0 : index
    %18 = vector.load %arg6[%c0_13, %c0_14] : memref<8x1xf32, #tpu.memory_space<vmem>>, vector<8x1xf32>
    tpu.vector_store %arg6[%c0_13, %c0_14], %17 {strides = array<i32>} : memref<8x1xf32, #tpu.memory_space<vmem>>, vector<8x1xf32>,
    return
  }
  func.func @transform_0(%arg0: i32) -> (i32, i32) {
    %c0_i32 = arith.constant 0 : i32
    %c0_i32_0 = arith.constant 0 : i32
    return %arg0, %c0_i32 : i32, i32
  }
  func.func @transform_1(%arg0: i32) -> (i32, i32) {
    %c0_i32 = arith.constant 0 : i32
    %c0_i32_0 = arith.constant 0 : i32
    %c0_i32_1 = arith.constant 0 : i32
    return %c0_i32, %c0_i32_0 : i32, i32
  }
  func.func @transform_2(%arg0: i32) -> (i32, i32) {
    %c0_i32 = arith.constant 0 : i32
    %c0_i32_0 = arith.constant 0 : i32
    %c0_i32_1 = arith.constant 0 : i32
    return %c0_i32, %c0_i32_0 : i32, i32
  }
  func.func @transform_3(%arg0: i32) -> (i32, i32) {
    %c0_i32 = arith.constant 0 : i32
    %c0_i32_0 = arith.constant 0 : i32
    %c0_i32_1 = arith.constant 0 : i32
    return %c0_i32, %c0_i32_0 : i32, i32
  }
  func.func @transform_4(%arg0: i32) -> (i32, i32) {
    %c0_i32 = arith.constant 0 : i32
    %c0_i32_0 = arith.constant 0 : i32
    %c0_i32_1 = arith.constant 0 : i32
    return %c0_i32, %c0_i32_0 : i32, i32
  }
  func.func @transform_5(%arg0: i32) -> (i32, i32) {
    %c0_i32 = arith.constant 0 : i32
    %c0_i32_0 = arith.constant 0 : i32
    return %arg0, %c0_i32 : i32, i32
  }
}

</mosaic_0001>

<llo_original>
// kernel: critic_forward.1
$region0: #{critic_forward.1}
  #allocation0 [shape = 'u32[]', space=smem, size = 0x4, offset = 0x4, fixed_abs, tag = 'smem constant byte address 0x4 - core index']
  #allocation1 [shape = 'u32[144,128]{1,0:T(1,128)}', space=vmem, size = 0x12000, scoped, tag = 'internal scratch']
  %s0 = inlined_call_operand.hbm [shape: f32[8,32], index: 0, kind: input, shape index: {}]
  %s1 = inlined_call_operand.hbm [shape: bf16[32,384], index: 1, kind: input, shape index: {}]
  %s2 = inlined_call_operand.vmem [shape: f32[1,384], index: 2, kind: input, shape index: {}]
  %s3 = inlined_call_operand.hbm [shape: bf16[384,384], index: 3, kind: input, shape index: {}]
  %s4 = inlined_call_operand.hbm [shape: bf16[384,128], index: 4, kind: input, shape index: {}]
  %s5 = inlined_call_operand.vmem [shape: f32[8,1], index: 5, kind: output, shape index: {}]
  %s6 = sld [smem:[#allocation0]]
  $region46: #{critic_forward.1} parent=0
    _
  %s8 = ssub.s32 1, %s6
  %s9 = scalar_select 0, %s8, %s6
  $region1: #{critic_forward.1} parent=0
    #allocation2 [shape = 'u8[4096]{0}', space=vmem, size = 0x1000, scoped, tag = 'input window, operand 0, single buffered']
    #allocation3 [shape = 's32[1]{0}', space=sflag, size = 0x4, scoped, tag = 'scoped memory for critic_forward.1']
    #allocation4 [shape = 'u8[24576]{0}', space=vmem, size = 0x6000, scoped, tag = 'input window, operand 1, single buffered']
    #allocation5 [shape = 's32[1]{0}', space=sflag, size = 0x4, scoped, tag = 'scoped memory for critic_forward.1']
    #allocation6 [shape = 'u8[294912]{0}', space=vmem, size = 0x48000, scoped, tag = 'input window, operand 3, single buffered']
    #allocation7 [shape = 'u8[98304]{0}', space=vmem, size = 0x18000, scoped, tag = 'input window, operand 4, single buffered']
    #allocation8 [shape = 's32[1]{0}', space=sflag, size = 0x4, scoped, tag = 'scoped memory for critic_forward.1']
    %10 = vsyncpa [#allocation3], 0
    %11 = vsyncpa [#allocation5], 0
    %12 = vsyncpa [#allocation8], 0
    // Predicated region
    $region2: #{critic_forward.1} parent=1 // pred_check
      _
    $region3: #{critic_forward.1} parent=1 // pred_check_branch
      %14 = sbr.rel (0) target = $region5
    $region4: #{critic_forward.1} parent=1 // pred_region
      %s16 = ssub.s32 128, 128
      %17 = vsyncadd [#allocation3], %s16
      %s19 = sshll.u32 [#allocation2], 4
      %s20 = int_to_ptr.vmem [resolvable:$true] %s19
      %22 = dma.hbm_to_vmem [thread:$0]  %s0, 128, %s20, [#allocation3]
    $region5: #{critic_forward.1} parent=1 // pred_fallthru
      _
    // Predicated region
    $region6: #{critic_forward.1} parent=1 // pred_check
      _
    $region7: #{critic_forward.1} parent=1 // pred_check_branch
      %24 = sbr.rel (0) target = $region9
    $region8: #{critic_forward.1} parent=1 // pred_region
      %s26 = ssub.s32 768, 768
      %27 = vsyncadd [#allocation5], %s26
      %s28 = sshll.u32 [#allocation4], 4
      %s29 = int_to_ptr.vmem [resolvable:$true] %s28
      %34 = dma.hbm_to_vmem [thread:$0]  %s1, 768, %s29, [#allocation5], 192, 192, 12
    $region9: #{critic_forward.1} parent=1 // pred_fallthru
      _
    // Predicated region
    $region10: #{critic_forward.1} parent=1 // pred_check
      _
    $region11: #{critic_forward.1} parent=1 // pred_check_branch
      %36 = sbr.rel (0) target = $region13
    $region12: #{critic_forward.1} parent=1 // pred_region
      _
    $region13: #{critic_forward.1} parent=1 // pred_fallthru
      _
    // Predicated region
    $region14: #{critic_forward.1} parent=1 // pred_check
      _
    $region15: #{critic_forward.1} parent=1 // pred_check_branch
      %38 = sbr.rel (0) target = $region17
    $region16: #{critic_forward.1} parent=1 // pred_region
      %s40 = ssub.s32 9216, 9216
      %41 = vsyncadd [#allocation5], %s40
      %s42 = sshll.u32 [#allocation6], 4
      %s43 = int_to_ptr.vmem [resolvable:$true] %s42
      %48 = dma.hbm_to_vmem [thread:$0]  %s3, 9216, %s43, [#allocation5], 192, 192, 12
    $region17: #{critic_forward.1} parent=1 // pred_fallthru
      _
    // Predicated region
    $region18: #{critic_forward.1} parent=1 // pred_check
      _
    $region19: #{critic_forward.1} parent=1 // pred_check_branch
      %50 = sbr.rel (0) target = $region21
    $region20: #{critic_forward.1} parent=1 // pred_region
      %s52 = ssub.s32 3072, 3072
      %53 = vsyncadd [#allocation8], %s52
      %s54 = sshll.u32 [#allocation7], 4
      %s55 = int_to_ptr.vmem [resolvable:$true] %s54
      %60 = dma.hbm_to_vmem [thread:$0]  %s4, 3072, %s55, [#allocation8], 64, 64, 4
    $region21: #{critic_forward.1} parent=1 // pred_fallthru
      _
    // Predicated region
    $region22: #{critic_forward.1} parent=1 // pred_check
      _
    $region23: #{critic_forward.1} parent=1 // pred_check_branch
      %62 = sbr.rel (0) target = $region25
    $region24: #{critic_forward.1} parent=1 // pred_region
      %63 = dma.done [#allocation3], 128
    $region25: #{critic_forward.1} parent=1 // pred_fallthru
      _
    // Predicated region
    $region26: #{critic_forward.1} parent=1 // pred_check
      _
    $region27: #{critic_forward.1} parent=1 // pred_check_branch
      %65 = sbr.rel (0) target = $region29
    $region28: #{critic_forward.1} parent=1 // pred_region
      %66 = dma.done [#allocation5], 768
    $region29: #{critic_forward.1} parent=1 // pred_fallthru
      _
    // Predicated region
    $region30: #{critic_forward.1} parent=1 // pred_check
      _
    $region31: #{critic_forward.1} parent=1 // pred_check_branch
      %68 = sbr.rel (0) target = $region33
    $region32: #{critic_forward.1} parent=1 // pred_region
      %69 = dma.done [#allocation5], 9216
    $region33: #{critic_forward.1} parent=1 // pred_fallthru
      _
    // Predicated region
    $region34: #{critic_forward.1} parent=1 // pred_check
      _
    $region35: #{critic_forward.1} parent=1 // pred_check_branch
      %71 = sbr.rel (0) target = $region37
    $region36: #{critic_forward.1} parent=1 // pred_region
      %72 = dma.done [#allocation8], 3072
    $region37: #{critic_forward.1} parent=1 // pred_fallthru
      _
    %v74 = vld [vmem:[#allocation2] sm:$0xff]
    %v75 = vpack.c.bf16 %v74, %v74
    %v76 = vld [vmem:[#allocation4] sm:$0xff]
    %v77 = vld [vmem:[#allocation4 + $0x8] sm:$0xf]
    %v78 = vld [vmem:[#allocation4 + $0xc] sm:$0xff]
    %v79 = vld [vmem:[#allocation4 + $0x14] sm:$0xf]
    %v80 = vld [vmem:[#allocation4 + $0x18] sm:$0xff]
    %v81 = vld [vmem:[#allocation4 + $0x20] sm:$0xf]
    %v82 = vld [vmem:[#allocation4 + $0x24] sm:$0xff]
    %v83 = vld [vmem:[#allocation4 + $0x2c] sm:$0xf]
    %v84 = vld [vmem:[%s2] sm:$0x7]
    %v86 = vlaneseq
    %v87 = vshrl.u32 %v86, 7
    %v88 = vsub.s32 0, %v87
    %v89 = vrot.slane %v84, %v88
    %v90 = vlaneseq
    %v91 = vshrl.u32 %v90, 7
    %v92 = vsub.s32 1, %v91
    %v93 = vrot.slane %v84, %v92
    %v94 = vlaneseq
    %v95 = vshrl.u32 %v94, 7
    %v96 = vsub.s32 2, %v95
    %v97 = vrot.slane %v84, %v96
    %v109 = vunpack.c.l.b16 %v76
    %v110 = vunpack.c.h.b16 %v76
    %v111 = vunpack.c.l.b16 %v77
    %v112 = vunpack.c.l.b16 %v78
    %v113 = vunpack.c.h.b16 %v78
    %v114 = vunpack.c.l.b16 %v79
    %v115 = vunpack.c.l.b16 %v80
    %v116 = vunpack.c.h.b16 %v80
    %v117 = vunpack.c.l.b16 %v81
    %v118 = vunpack.c.l.b16 %v82
    %v119 = vunpack.c.h.b16 %v82
    %v120 = vunpack.c.l.b16 %v83
    %v121 = vpack.c.b16 %v112, %v109
    %v122 = vpack.c.b16 %v113, %v110
    %v123 = vpack.c.b16 %v114, %v111
    %v124 = vpack.c.b16 %v118, %v115
    %v125 = vpack.c.b16 %v119, %v116
    %v126 = vpack.c.b16 %v120, %v117
    %vm133 = vcmask 261120
    %v135 = vsel %vm133, %v75, 0
    %137 = vmatprep.subr.bf16.mxu0 0
    %138 = vmatpush1.bf16.msra.mxu0 0
    %139 = vmatprep.subr.bf16.mxu0 0
    %140 = vmatpush1.bf16.msra.mxu0 0
    %141 = vmatprep.subr.bf16.mxu0 0
    %142 = vmatpush1.bf16.msra.mxu0 0
    %143 = vmatprep.subr.bf16.mxu0 0
    %144 = vmatpush1.bf16.msra.mxu0 0
    %145 = vmatprep.subr.bf16.mxu0 0
    %146 = vmatpush1.bf16.msra.mxu0 0
    %147 = vmatprep.subr.bf16.mxu0 0
    %148 = vmatpush1.bf16.msra.mxu0 0
    %149 = vmatprep.subr.bf16.mxu0 %v125
    %150 = vmatpush1.bf16.msra.mxu0 %v124
    %151 = vmatprep.subr.bf16.mxu0 %v122
    %152 = vmatpush1.bf16.msra.mxu0 %v121
    %153 = vmatprep.subr.bf16.mxu0 0
    %154 = vmatpush2.bf16.msra.mxu0 0
    %155 = vmatprep.subr.bf16.mxu0 0
    %156 = vmatpush2.bf16.msra.mxu0 0
    %157 = vmatprep.subr.bf16.mxu0 0
    %158 = vmatpush2.bf16.msra.mxu0 0
    %159 = vmatprep.subr.bf16.mxu0 0
    %160 = vmatpush2.bf16.msra.mxu0 0
    %161 = vmatprep.subr.bf16.mxu0 0
    %162 = vmatpush2.bf16.msra.mxu0 0
    %163 = vmatprep.subr.bf16.mxu0 0
    %164 = vmatpush2.bf16.msra.mxu0 0
    %165 = vmatprep.subr.bf16.mxu0 0
    %166 = vmatpush2.bf16.msra.mxu0 0
    %167 = vmatprep.subr.bf16.mxu0 0
    %168 = vmatpush2.bf16.msra.mxu0 0
    %169 = vmatprep.mubr.bf16.mxu0 0
    %170 = vmatmul.mubr.bf16.gmra.mxu0 %v135
    %v171 = vpop.f32.mrf.mxu0
    %v172 = vadd.f32 %v89, %v171
    %v173 = vpop.f32.mrf.mxu0
    %v174 = vadd.f32 %v93, %v173
    %v175 = vpop.f32.mrf.mxu0
    %v176 = vpop.f32.mrf.mxu0
    %177 = vdwg.mxu0
    %178 = vmatprep.subr.bf16.mxu0 0
    %179 = vmatpush1.bf16.msra.mxu0 0
    %180 = vmatprep.subr.bf16.mxu0 0
    %181 = vmatpush1.bf16.msra.mxu0 0
    %182 = vmatprep.subr.bf16.mxu0 0
    %183 = vmatpush1.bf16.msra.mxu0 0
    %184 = vmatprep.subr.bf16.mxu0 0
    %185 = vmatpush1.bf16.msra.mxu0 0
    %186 = vmatprep.subr.bf16.mxu0 0
    %187 = vmatpush1.bf16.msra.mxu0 0
    %188 = vmatprep.subr.bf16.mxu0 0
    %189 = vmatpush1.bf16.msra.mxu0 0
    %190 = vmatprep.subr.bf16.mxu0 0
    %191 = vmatpush1.bf16.msra.mxu0 %v126
    %192 = vmatprep.subr.bf16.mxu0 0
    %193 = vmatpush1.bf16.msra.mxu0 %v123
    %194 = vmatprep.subr.bf16.mxu0 0
    %195 = vmatpush2.bf16.msra.mxu0 0
    %196 = vmatprep.subr.bf16.mxu0 0
    %197 = vmatpush2.bf16.msra.mxu0 0
    %198 = vmatprep.subr.bf16.mxu0 0
    %199 = vmatpush2.bf16.msra.mxu0 0
    %200 = vmatprep.subr.bf16.mxu0 0
    %201 = vmatpush2.bf16.msra.mxu0 0
    %202 = vmatprep.subr.bf16.mxu0 0
    %203 = vmatpush2.bf16.msra.mxu0 0
    %204 = vmatprep.subr.bf16.mxu0 0
    %205 = vmatpush2.bf16.msra.mxu0 0
    %206 = vmatprep.subr.bf16.mxu0 0
    %207 = vmatpush2.bf16.msra.mxu0 0
    %208 = vmatprep.subr.bf16.mxu0 0
    %209 = vmatpush2.bf16.msra.mxu0 0
    %210 = vmatprep.mubr.bf16.mxu0 0
    %211 = vmatmul.mubr.bf16.gmra.mxu0 %v135
    %v212 = vpop.f32.mrf.mxu0
    %v213 = vadd.f32 %v97, %v212
    %v214 = vpop.f32.mrf.mxu0
    %v215 = vpop.f32.mrf.mxu0
    %v216 = vpop.f32.mrf.mxu0
    %217 = vdwg.mxu0
    %v218 = vmax.f32 %v172, 0.0
    %v219 = vmax.f32 %v174, 0.0
    %v220 = vmax.f32 %v213, 0.0
    %v221 = vpack.c.bf16 %v218, %v218
    %v222 = vpack.c.bf16 %v219, %v219
    %v223 = vpack.c.bf16 %v220, %v220
    %v224 = vld [vmem:[#allocation6] sm:$0xff]
    %v225 = vld [vmem:[#allocation6 + $0x8] sm:$0xf]
    %v226 = vld [vmem:[#allocation6 + $0xc] sm:$0xff]
    %v227 = vld [vmem:[#allocation6 + $0x14] sm:$0xf]
    %v228 = vld [vmem:[#allocation6 + $0x18] sm:$0xff]
    %v229 = vld [vmem:[#allocation6 + $0x20] sm:$0xf]
    %v230 = vld [vmem:[#allocation6 + $0x24] sm:$0xff]
    %v231 = vld [vmem:[#allocation6 + $0x2c] sm:$0xf]
    %v232 = vld [vmem:[#allocation6 + $0x30] sm:$0xff]
    %v233 = vld [vmem:[#allocation6 + $0x38] sm:$0xf]
    %v234 = vld [vmem:[#allocation6 + $0x3c] sm:$0xff]
    %v235 = vld [vmem:[#allocation6 + $0x44] sm:$0xf]
    %v236 = vld [vmem:[#allocation6 + $0x48] sm:$0xff]
    %v237 = vld [vmem:[#allocation6 + $0x50] sm:$0xf]
    %v238 = vld [vmem:[#allocation6 + $0x54] sm:$0xff]
    %v239 = vld [vmem:[#allocation6 + $0x5c] sm:$0xf]
    %v240 = vld [vmem:[#allocation6 + $0x60] sm:$0xff]
    %v241 = vld [vmem:[#allocation6 + $0x68] sm:$0xf]
    %v242 = vld [vmem:[#allocation6 + $0x6c] sm:$0xff]
    %v243 = vld [vmem:[#allocation6 + $0x74] sm:$0xf]
    %v244 = vld [vmem:[#allocation6 + $0x78] sm:$0xff]
    %v245 = vld [vmem:[#allocation6 + $0x80] sm:$0xf]
    %v246 = vld [vmem:[#allocation6 + $0x84] sm:$0xff]
    %v247 = vld [vmem:[#allocation6 + $0x8c] sm:$0xf]
    %v248 = vld [vmem:[#allocation6 + $0x90] sm:$0xff]
    %v249 = vld [vmem:[#allocation6 + $0x98] sm:$0xf]
    %v250 = vld [vmem:[#allocation6 + $0x9c] sm:$0xff]
    %v251 = vld [vmem:[#allocation6 + $0xa4] sm:$0xf]
    %v252 = vld [vmem:[#allocation6 + $0xa8] sm:$0xff]
    %v253 = vld [vmem:[#allocation6 + $0xb0] sm:$0xf]
    %v254 = vld [vmem:[#allocation6 + $0xb4] sm:$0xff]
    %v255 = vld [vmem:[#allocation6 + $0xbc] sm:$0xf]
    %v256 = vld [vmem:[#allocation6 + $0xc0] sm:$0xff]
    %v257 = vld [vmem:[#allocation6 + $0xc8] sm:$0xf]
    %v258 = vld [vmem:[#allocation6 + $0xcc] sm:$0xff]
    %v259 = vld [vmem:[#allocation6 + $0xd4] sm:$0xf]
    %v260 = vld [vmem:[#allocation6 + $0xd8] sm:$0xff]
    %v261 = vld [vmem:[#allocation6 + $0xe0] sm:$0xf]
    %v262 = vld [vmem:[#allocation6 + $0xe4] sm:$0xff]
    %v263 = vld [vmem:[#allocation6 + $0xec] sm:$0xf]
    %v264 = vld [vmem:[#allocation6 + $0xf0] sm:$0xff]
    %v265 = vld [vmem:[#allocation6 + $0xf8] sm:$0xf]
    %v266 = vld [vmem:[#allocation6 + $0xfc] sm:$0xff]
    %v267 = vld [vmem:[#allocation6 + $0x104] sm:$0xf]
    %v268 = vld [vmem:[#allocation6 + $0x108] sm:$0xff]
    %v269 = vld [vmem:[#allocation6 + $0x110] sm:$0xf]
    %v270 = vld [vmem:[#allocation6 + $0x114] sm:$0xff]
    %v271 = vld [vmem:[#allocation6 + $0x11c] sm:$0xf]
    %v272 = vld [vmem:[#allocation6 + $0x120] sm:$0xff]
    %v273 = vld [vmem:[#allocation6 + $0x128] sm:$0xf]
    %v274 = vld [vmem:[#allocation6 + $0x12c] sm:$0xff]
    %v275 = vld [vmem:[#allocation6 + $0x134] sm:$0xf]
    %v276 = vld [vmem:[#allocation6 + $0x138] sm:$0xff]
    %v277 = vld [vmem:[#allocation6 + $0x140] sm:$0xf]
    %v278 = vld [vmem:[#allocation6 + $0x144] sm:$0xff]
    %v279 = vld [vmem:[#allocation6 + $0x14c] sm:$0xf]
    %v280 = vld [vmem:[#allocation6 + $0x150] sm:$0xff]
    %v281 = vld [vmem:[#allocation6 + $0x158] sm:$0xf]
    %v282 = vld [vmem:[#allocation6 + $0x15c] sm:$0xff]
    %v283 = vld [vmem:[#allocation6 + $0x164] sm:$0xf]
    %v284 = vld [vmem:[#allocation6 + $0x168] sm:$0xff]
    %v285 = vld [vmem:[#allocation6 + $0x170] sm:$0xf]
    %v286 = vld [vmem:[#allocation6 + $0x174] sm:$0xff]
    %v287 = vld [vmem:[#allocation6 + $0x17c] sm:$0xf]
    %v288 = vld [vmem:[#allocation6 + $0x180] sm:$0xff]
    %v289 = vld [vmem:[#allocation6 + $0x188] sm:$0xf]
    %v290 = vld [vmem:[#allocation6 + $0x18c] sm:$0xff]
    %v291 = vld [vmem:[#allocation6 + $0x194] sm:$0xf]
    %v292 = vld [vmem:[#allocation6 + $0x198] sm:$0xff]
    %v293 = vld [vmem:[#allocation6 + $0x1a0] sm:$0xf]
    %v294 = vld [vmem:[#allocation6 + $0x1a4] sm:$0xff]
    %v295 = vld [vmem:[#allocation6 + $0x1ac] sm:$0xf]
    %v296 = vld [vmem:[#allocation6 + $0x1b0] sm:$0xff]
    %v297 = vld [vmem:[#allocation6 + $0x1b8] sm:$0xf]
    %v298 = vld [vmem:[#allocation6 + $0x1bc] sm:$0xff]
    %v299 = vld [vmem:[#allocation6 + $0x1c4] sm:$0xf]
    %v300 = vld [vmem:[#allocation6 + $0x1c8] sm:$0xff]
    %v301 = vld [vmem:[#allocation6 + $0x1d0] sm:$0xf]
    %v302 = vld [vmem:[#allocation6 + $0x1d4] sm:$0xff]
    %v303 = vld [vmem:[#allocation6 + $0x1dc] sm:$0xf]
    %v304 = vld [vmem:[#allocation6 + $0x1e0] sm:$0xff]
    %v305 = vld [vmem:[#allocation6 + $0x1e8] sm:$0xf]
    %v306 = vld [vmem:[#allocation6 + $0x1ec] sm:$0xff]
    %v307 = vld [vmem:[#allocation6 + $0x1f4] sm:$0xf]
    %v308 = vld [vmem:[#allocation6 + $0x1f8] sm:$0xff]
    %v309 = vld [vmem:[#allocation6 + $0x200] sm:$0xf]
    %v310 = vld [vmem:[#allocation6 + $0x204] sm:$0xff]
    %v311 = vld [vmem:[#allocation6 + $0x20c] sm:$0xf]
    %v312 = vld [vmem:[#allocation6 + $0x210] sm:$0xff]
    %v313 = vld [vmem:[#allocation6 + $0x218] sm:$0xf]
    %v314 = vld [vmem:[#allocation6 + $0x21c] sm:$0xff]
    %v315 = vld [vmem:[#allocation6 + $0x224] sm:$0xf]
    %v316 = vld [vmem:[#allocation6 + $0x228] sm:$0xff]
    %v317 = vld [vmem:[#allocation6 + $0x230] sm:$0xf]
    %v318 = vld [vmem:[#allocation6 + $0x234] sm:$0xff]
    %v319 = vld [vmem:[#allocation6 + $0x23c] sm:$0xf]
    %v416 = vunpack.c.l.b16 %v224
    %v417 = vunpack.c.h.b16 %v224
    %v418 = vunpack.c.l.b16 %v225
    %v419 = vunpack.c.l.b16 %v226
    %v420 = vunpack.c.h.b16 %v226
    %v421 = vunpack.c.l.b16 %v227
    %v422 = vunpack.c.l.b16 %v228
    %v423 = vunpack.c.h.b16 %v228
    %v424 = vunpack.c.l.b16 %v229
    %v425 = vunpack.c.l.b16 %v230
    %v426 = vunpack.c.h.b16 %v230
    %v427 = vunpack.c.l.b16 %v231
    %v428 = vunpack.c.l.b16 %v232
    %v429 = vunpack.c.h.b16 %v232
    %v430 = vunpack.c.l.b16 %v233
    %v431 = vunpack.c.l.b16 %v234
    %v432 = vunpack.c.h.b16 %v234
    %v433 = vunpack.c.l.b16 %v235
    %v434 = vunpack.c.l.b16 %v236
    %v435 = vunpack.c.h.b16 %v236
    %v436 = vunpack.c.l.b16 %v237
    %v437 = vunpack.c.l.b16 %v238
    %v438 = vunpack.c.h.b16 %v238
    %v439 = vunpack.c.l.b16 %v239
    %v440 = vunpack.c.l.b16 %v240
    %v441 = vunpack.c.h.b16 %v240
    %v442 = vunpack.c.l.b16 %v241
    %v443 = vunpack.c.l.b16 %v242
    %v444 = vunpack.c.h.b16 %v242
    %v445 = vunpack.c.l.b16 %v243
    %v446 = vunpack.c.l.b16 %v244
    %v447 = vunpack.c.h.b16 %v244
    %v448 = vunpack.c.l.b16 %v245
    %v449 = vunpack.c.l.b16 %v246
    %v450 = vunpack.c.h.b16 %v246
    %v451 = vunpack.c.l.b16 %v247
    %v452 = vunpack.c.l.b16 %v248
    %v453 = vunpack.c.h.b16 %v248
    %v454 = vunpack.c.l.b16 %v249
    %v455 = vunpack.c.l.b16 %v250
    %v456 = vunpack.c.h.b16 %v250
    %v457 = vunpack.c.l.b16 %v251
    %v458 = vunpack.c.l.b16 %v252
    %v459 = vunpack.c.h.b16 %v252
    %v460 = vunpack.c.l.b16 %v253
    %v461 = vunpack.c.l.b16 %v254
    %v462 = vunpack.c.h.b16 %v254
    %v463 = vunpack.c.l.b16 %v255
    %v464 = vunpack.c.l.b16 %v256
    %v465 = vunpack.c.h.b16 %v256
    %v466 = vunpack.c.l.b16 %v257
    %v467 = vunpack.c.l.b16 %v258
    %v468 = vunpack.c.h.b16 %v258
    %v469 = vunpack.c.l.b16 %v259
    %v470 = vunpack.c.l.b16 %v260
    %v471 = vunpack.c.h.b16 %v260
    %v472 = vunpack.c.l.b16 %v261
    %v473 = vunpack.c.l.b16 %v262
    %v474 = vunpack.c.h.b16 %v262
    %v475 = vunpack.c.l.b16 %v263
    %v476 = vunpack.c.l.b16 %v264
    %v477 = vunpack.c.h.b16 %v264
    %v478 = vunpack.c.l.b16 %v265
    %v479 = vunpack.c.l.b16 %v266
    %v480 = vunpack.c.h.b16 %v266
    %v481 = vunpack.c.l.b16 %v267
    %v482 = vunpack.c.l.b16 %v268
    %v483 = vunpack.c.h.b16 %v268
    %v484 = vunpack.c.l.b16 %v269
    %v485 = vunpack.c.l.b16 %v270
    %v486 = vunpack.c.h.b16 %v270
    %v487 = vunpack.c.l.b16 %v271
    %v488 = vunpack.c.l.b16 %v272
    %v489 = vunpack.c.h.b16 %v272
    %v490 = vunpack.c.l.b16 %v273
    %v491 = vunpack.c.l.b16 %v274
    %v492 = vunpack.c.h.b16 %v274
    %v493 = vunpack.c.l.b16 %v275
    %v494 = vunpack.c.l.b16 %v276
    %v495 = vunpack.c.h.b16 %v276
    %v496 = vunpack.c.l.b16 %v277
    %v497 = vunpack.c.l.b16 %v278
    %v498 = vunpack.c.h.b16 %v278
    %v499 = vunpack.c.l.b16 %v279
    %v500 = vunpack.c.l.b16 %v280
    %v501 = vunpack.c.h.b16 %v280
    %v502 = vunpack.c.l.b16 %v281
    %v503 = vunpack.c.l.b16 %v282
    %v504 = vunpack.c.h.b16 %v282
    %v505 = vunpack.c.l.b16 %v283
    %v506 = vunpack.c.l.b16 %v284
    %v507 = vunpack.c.h.b16 %v284
    %v508 = vunpack.c.l.b16 %v285
    %v509 = vunpack.c.l.b16 %v286
    %v510 = vunpack.c.h.b16 %v286
    %v511 = vunpack.c.l.b16 %v287
    %v512 = vunpack.c.l.b16 %v288
    %v513 = vunpack.c.h.b16 %v288
    %v514 = vunpack.c.l.b16 %v289
    %v515 = vunpack.c.l.b16 %v290
    %v516 = vunpack.c.h.b16 %v290
    %v517 = vunpack.c.l.b16 %v291
    %v518 = vunpack.c.l.b16 %v292
    %v519 = vunpack.c.h.b16 %v292
    %v520 = vunpack.c.l.b16 %v293
    %v521 = vunpack.c.l.b16 %v294
    %v522 = vunpack.c.h.b16 %v294
    %v523 = vunpack.c.l.b16 %v295
    %v524 = vunpack.c.l.b16 %v296
    %v525 = vunpack.c.h.b16 %v296
    %v526 = vunpack.c.l.b16 %v297
    %v527 = vunpack.c.l.b16 %v298
    %v528 = vunpack.c.h.b16 %v298
    %v529 = vunpack.c.l.b16 %v299
    %v530 = vunpack.c.l.b16 %v300
    %v531 = vunpack.c.h.b16 %v300
    %v532 = vunpack.c.l.b16 %v301
    %v533 = vunpack.c.l.b16 %v302
    %v534 = vunpack.c.h.b16 %v302
    %v535 = vunpack.c.l.b16 %v303
    %v536 = vunpack.c.l.b16 %v304
    %v537 = vunpack.c.h.b16 %v304
    %v538 = vunpack.c.l.b16 %v305
    %v539 = vunpack.c.l.b16 %v306
    %v540 = vunpack.c.h.b16 %v306
    %v541 = vunpack.c.l.b16 %v307
    %v542 = vunpack.c.l.b16 %v308
    %v543 = vunpack.c.h.b16 %v308
    %v544 = vunpack.c.l.b16 %v309
    %v545 = vunpack.c.l.b16 %v310
    %v546 = vunpack.c.h.b16 %v310
    %v547 = vunpack.c.l.b16 %v311
    %v548 = vunpack.c.l.b16 %v312
    %v549 = vunpack.c.h.b16 %v312
    %v550 = vunpack.c.l.b16 %v313
    %v551 = vunpack.c.l.b16 %v314
    %v552 = vunpack.c.h.b16 %v314
    %v553 = vunpack.c.l.b16 %v315
    %v554 = vunpack.c.l.b16 %v316
    %v555 = vunpack.c.h.b16 %v316
    %v556 = vunpack.c.l.b16 %v317
    %v557 = vunpack.c.l.b16 %v318
    %v558 = vunpack.c.h.b16 %v318
    %v559 = vunpack.c.l.b16 %v319
    %v560 = vpack.c.b16 %v419, %v416
    %v561 = vpack.c.b16 %v420, %v417
    %v562 = vpack.c.b16 %v421, %v418
    %v563 = vpack.c.b16 %v425, %v422
    %v564 = vpack.c.b16 %v426, %v423
    %v565 = vpack.c.b16 %v427, %v424
    %v566 = vpack.c.b16 %v431, %v428
    %v567 = vpack.c.b16 %v432, %v429
    %v568 = vpack.c.b16 %v433, %v430
    %v569 = vpack.c.b16 %v437, %v434
    %v570 = vpack.c.b16 %v438, %v435
    %v571 = vpack.c.b16 %v439, %v436
    %v572 = vpack.c.b16 %v443, %v440
    %v573 = vpack.c.b16 %v444, %v441
    %v574 = vpack.c.b16 %v445, %v442
    %v575 = vpack.c.b16 %v449, %v446
    %v576 = vpack.c.b16 %v450, %v447
    %v577 = vpack.c.b16 %v451, %v448
    %v578 = vpack.c.b16 %v455, %v452
    %v579 = vpack.c.b16 %v456, %v453
    %v580 = vpack.c.b16 %v457, %v454
    %v581 = vpack.c.b16 %v461, %v458
    %v582 = vpack.c.b16 %v462, %v459
    %v583 = vpack.c.b16 %v463, %v460
    %v584 = vpack.c.b16 %v467, %v464
    %v585 = vpack.c.b16 %v468, %v465
    %v586 = vpack.c.b16 %v469, %v466
    %v587 = vpack.c.b16 %v473, %v470
    %v588 = vpack.c.b16 %v474, %v471
    %v589 = vpack.c.b16 %v475, %v472
    %v590 = vpack.c.b16 %v479, %v476
    %v591 = vpack.c.b16 %v480, %v477
    %v592 = vpack.c.b16 %v481, %v478
    %v593 = vpack.c.b16 %v485, %v482
    %v594 = vpack.c.b16 %v486, %v483
    %v595 = vpack.c.b16 %v487, %v484
    %v596 = vpack.c.b16 %v491, %v488
    %v597 = vpack.c.b16 %v492, %v489
    %v598 = vpack.c.b16 %v493, %v490
    %v599 = vpack.c.b16 %v497, %v494
    %v600 = vpack.c.b16 %v498, %v495
    %v601 = vpack.c.b16 %v499, %v496
    %v602 = vpack.c.b16 %v503, %v500
    %v603 = vpack.c.b16 %v504, %v501
    %v604 = vpack.c.b16 %v505, %v502
    %v605 = vpack.c.b16 %v509, %v506
    %v606 = vpack.c.b16 %v510, %v507
    %v607 = vpack.c.b16 %v511, %v508
    %v608 = vpack.c.b16 %v515, %v512
    %v609 = vpack.c.b16 %v516, %v513
    %v610 = vpack.c.b16 %v517, %v514
    %v611 = vpack.c.b16 %v521, %v518
    %v612 = vpack.c.b16 %v522, %v519
    %v613 = vpack.c.b16 %v523, %v520
    %v614 = vpack.c.b16 %v527, %v524
    %v615 = vpack.c.b16 %v528, %v525
    %v616 = vpack.c.b16 %v529, %v526
    %v617 = vpack.c.b16 %v533, %v530
    %v618 = vpack.c.b16 %v534, %v531
    %v619 = vpack.c.b16 %v535, %v532
    %v620 = vpack.c.b16 %v539, %v536
    %v621 = vpack.c.b16 %v540, %v537
    %v622 = vpack.c.b16 %v541, %v538
    %v623 = vpack.c.b16 %v545, %v542
    %v624 = vpack.c.b16 %v546, %v543
    %v625 = vpack.c.b16 %v547, %v544
    %v626 = vpack.c.b16 %v551, %v548
    %v627 = vpack.c.b16 %v552, %v549
    %v628 = vpack.c.b16 %v553, %v550
    %v629 = vpack.c.b16 %v557, %v554
    %v630 = vpack.c.b16 %v558, %v555
    %v631 = vpack.c.b16 %v559, %v556
    %704 = vmatprep.subr.bf16.mxu0 %v582
    %705 = vmatpush1.bf16.msra.mxu0 %v581
    %706 = vmatprep.subr.bf16.mxu0 %v579
    %707 = vmatpush1.bf16.msra.mxu0 %v578
    %708 = vmatprep.subr.bf16.mxu0 %v576
    %709 = vmatpush1.bf16.msra.mxu0 %v575
    %710 = vmatprep.subr.bf16.mxu0 %v573
    %711 = vmatpush1.bf16.msra.mxu0 %v572
    %712 = vmatprep.subr.bf16.mxu0 %v570
    %713 = vmatpush1.bf16.msra.mxu0 %v569
    %714 = vmatprep.subr.bf16.mxu0 %v567
    %715 = vmatpush1.bf16.msra.mxu0 %v566
    %716 = vmatprep.subr.bf16.mxu0 %v564
    %717 = vmatpush1.bf16.msra.mxu0 %v563
    %718 = vmatprep.subr.bf16.mxu0 %v561
    %719 = vmatpush1.bf16.msra.mxu0 %v560
    %720 = vmatprep.subr.bf16.mxu0 %v606
    %721 = vmatpush2.bf16.msra.mxu0 %v605
    %722 = vmatprep.subr.bf16.mxu0 %v603
    %723 = vmatpush2.bf16.msra.mxu0 %v602
    %724 = vmatprep.subr.bf16.mxu0 %v600
    %725 = vmatpush2.bf16.msra.mxu0 %v599
    %726 = vmatprep.subr.bf16.mxu0 %v597
    %727 = vmatpush2.bf16.msra.mxu0 %v596
    %728 = vmatprep.subr.bf16.mxu0 %v594
    %729 = vmatpush2.bf16.msra.mxu0 %v593
    %730 = vmatprep.subr.bf16.mxu0 %v591
    %731 = vmatpush2.bf16.msra.mxu0 %v590
    %732 = vmatprep.subr.bf16.mxu0 %v588
    %733 = vmatpush2.bf16.msra.mxu0 %v587
    %734 = vmatprep.subr.bf16.mxu0 %v585
    %735 = vmatpush2.bf16.msra.mxu0 %v584
    %736 = vmatprep.mubr.bf16.mxu0 %v222
    %737 = vmatmul.mubr.bf16.gmra.mxu0 %v221
    %v738 = vpop.f32.mrf.mxu0
    %v739 = vadd.f32 0.0, %v738
    %v740 = vpop.f32.mrf.mxu0
    %v741 = vadd.f32 0.0, %v740
    %v742 = vpop.f32.mrf.mxu0
    %v743 = vpop.f32.mrf.mxu0
    %744 = vdwg.mxu0
    %745 = vmatprep.subr.bf16.mxu0 %v630
    %746 = vmatpush1.bf16.msra.mxu0 %v629
    %747 = vmatprep.subr.bf16.mxu0 %v627
    %748 = vmatpush1.bf16.msra.mxu0 %v626
    %749 = vmatprep.subr.bf16.mxu0 %v624
    %750 = vmatpush1.bf16.msra.mxu0 %v623
    %751 = vmatprep.subr.bf16.mxu0 %v621
    %752 = vmatpush1.bf16.msra.mxu0 %v620
    %753 = vmatprep.subr.bf16.mxu0 %v618
    %754 = vmatpush1.bf16.msra.mxu0 %v617
    %755 = vmatprep.subr.bf16.mxu0 %v615
    %756 = vmatpush1.bf16.msra.mxu0 %v614
    %757 = vmatprep.subr.bf16.mxu0 %v612
    %758 = vmatpush1.bf16.msra.mxu0 %v611
    %759 = vmatprep.subr.bf16.mxu0 %v609
    %760 = vmatpush1.bf16.msra.mxu0 %v608
    %761 = vmatprep.subr.bf16.mxu0 0
    %762 = vmatpush2.bf16.msra.mxu0 0
    %763 = vmatprep.subr.bf16.mxu0 0
    %764 = vmatpush2.bf16.msra.mxu0 0
    %765 = vmatprep.subr.bf16.mxu0 0
    %766 = vmatpush2.bf16.msra.mxu0 0
    %767 = vmatprep.subr.bf16.mxu0 0
    %768 = vmatpush2.bf16.msra.mxu0 0
    %769 = vmatprep.subr.bf16.mxu0 0
    %770 = vmatpush2.bf16.msra.mxu0 0
    %771 = vmatprep.subr.bf16.mxu0 0
    %772 = vmatpush2.bf16.msra.mxu0 0
    %773 = vmatprep.subr.bf16.mxu0 0
    %774 = vmatpush2.bf16.msra.mxu0 0
    %775 = vmatprep.subr.bf16.mxu0 0
    %776 = vmatpush2.bf16.msra.mxu0 0
    %777 = vmatprep.mubr.bf16.mxu0 0
    %778 = vmatmul.mubr.bf16.gmra.mxu0 %v223
    %v779 = vpop.f32.mrf.mxu0
    %v780 = vadd.f32 %v739, %v779
    %v781 = vpop.f32.mrf.mxu0
    %v782 = vadd.f32 %v741, %v781
    %v783 = vpop.f32.mrf.mxu0
    %v784 = vpop.f32.mrf.mxu0
    %785 = vdwg.mxu0
    %786 = vmatprep.subr.bf16.mxu0 0
    %787 = vmatpush1.bf16.msra.mxu0 %v583
    %788 = vmatprep.subr.bf16.mxu0 0
    %789 = vmatpush1.bf16.msra.mxu0 %v580
    %790 = vmatprep.subr.bf16.mxu0 0
    %791 = vmatpush1.bf16.msra.mxu0 %v577
    %792 = vmatprep.subr.bf16.mxu0 0
    %793 = vmatpush1.bf16.msra.mxu0 %v574
    %794 = vmatprep.subr.bf16.mxu0 0
    %795 = vmatpush1.bf16.msra.mxu0 %v571
    %796 = vmatprep.subr.bf16.mxu0 0
    %797 = vmatpush1.bf16.msra.mxu0 %v568
    %798 = vmatprep.subr.bf16.mxu0 0
    %799 = vmatpush1.bf16.msra.mxu0 %v565
    %800 = vmatprep.subr.bf16.mxu0 0
    %801 = vmatpush1.bf16.msra.mxu0 %v562
    %802 = vmatprep.subr.bf16.mxu0 0
    %803 = vmatpush2.bf16.msra.mxu0 %v607
    %804 = vmatprep.subr.bf16.mxu0 0
    %805 = vmatpush2.bf16.msra.mxu0 %v604
    %806 = vmatprep.subr.bf16.mxu0 0
    %807 = vmatpush2.bf16.msra.mxu0 %v601
    %808 = vmatprep.subr.bf16.mxu0 0
    %809 = vmatpush2.bf16.msra.mxu0 %v598
    %810 = vmatprep.subr.bf16.mxu0 0
    %811 = vmatpush2.bf16.msra.mxu0 %v595
    %812 = vmatprep.subr.bf16.mxu0 0
    %813 = vmatpush2.bf16.msra.mxu0 %v592
    %814 = vmatprep.subr.bf16.mxu0 0
    %815 = vmatpush2.bf16.msra.mxu0 %v589
    %816 = vmatprep.subr.bf16.mxu0 0
    %817 = vmatpush2.bf16.msra.mxu0 %v586
    %818 = vmatprep.mubr.bf16.mxu0 %v222
    %819 = vmatmul.mubr.bf16.gmra.mxu0 %v221
    %v820 = vpop.f32.mrf.mxu0
    %v821 = vadd.f32 0.0, %v820
    %v822 = vpop.f32.mrf.mxu0
    %v823 = vpop.f32.mrf.mxu0
    %v824 = vpop.f32.mrf.mxu0
    %825 = vdwg.mxu0
    %826 = vmatprep.subr.bf16.mxu0 0
    %827 = vmatpush1.bf16.msra.mxu0 %v631
    %828 = vmatprep.subr.bf16.mxu0 0
    %829 = vmatpush1.bf16.msra.mxu0 %v628
    %830 = vmatprep.subr.bf16.mxu0 0
    %831 = vmatpush1.bf16.msra.mxu0 %v625
    %832 = vmatprep.subr.bf16.mxu0 0
    %833 = vmatpush1.bf16.msra.mxu0 %v622
    %834 = vmatprep.subr.bf16.mxu0 0
    %835 = vmatpush1.bf16.msra.mxu0 %v619
    %836 = vmatprep.subr.bf16.mxu0 0
    %837 = vmatpush1.bf16.msra.mxu0 %v616
    %838 = vmatprep.subr.bf16.mxu0 0
    %839 = vmatpush1.bf16.msra.mxu0 %v613
    %840 = vmatprep.subr.bf16.mxu0 0
    %841 = vmatpush1.bf16.msra.mxu0 %v610
    %842 = vmatprep.subr.bf16.mxu0 0
    %843 = vmatpush2.bf16.msra.mxu0 0
    %844 = vmatprep.subr.bf16.mxu0 0
    %845 = vmatpush2.bf16.msra.mxu0 0
    %846 = vmatprep.subr.bf16.mxu0 0
    %847 = vmatpush2.bf16.msra.mxu0 0
    %848 = vmatprep.subr.bf16.mxu0 0
    %849 = vmatpush2.bf16.msra.mxu0 0
    %850 = vmatprep.subr.bf16.mxu0 0
    %851 = vmatpush2.bf16.msra.mxu0 0
    %852 = vmatprep.subr.bf16.mxu0 0
    %853 = vmatpush2.bf16.msra.mxu0 0
    %854 = vmatprep.subr.bf16.mxu0 0
    %855 = vmatpush2.bf16.msra.mxu0 0
    %856 = vmatprep.subr.bf16.mxu0 0
    %857 = vmatpush2.bf16.msra.mxu0 0
    %858 = vmatprep.mubr.bf16.mxu0 0
    %859 = vmatmul.mubr.bf16.gmra.mxu0 %v223
    %v860 = vpop.f32.mrf.mxu0
    %v861 = vadd.f32 %v821, %v860
    %v862 = vpop.f32.mrf.mxu0
    %v863 = vpop.f32.mrf.mxu0
    %v864 = vpop.f32.mrf.mxu0
    %865 = vdwg.mxu0
    %v866 = vmax.f32 %v780, 0.0
    %v867 = vmax.f32 %v782, 0.0
    %v868 = vmax.f32 %v861, 0.0
    %v869 = vpack.c.bf16 %v866, %v866
    %v870 = vpack.c.bf16 %v867, %v867
    %v871 = vpack.c.bf16 %v868, %v868
    %v872 = vld [vmem:[#allocation7] sm:$0xf]
    %v873 = vld [vmem:[#allocation7 + $0x4] sm:$0xf]
    %v874 = vld [vmem:[#allocation7 + $0x8] sm:$0xf]
    %v875 = vld [vmem:[#allocation7 + $0xc] sm:$0xf]
    %v876 = vld [vmem:[#allocation7 + $0x10] sm:$0xf]
    %v877 = vld [vmem:[#allocation7 + $0x14] sm:$0xf]
    %v878 = vld [vmem:[#allocation7 + $0x18] sm:$0xf]
    %v879 = vld [vmem:[#allocation7 + $0x1c] sm:$0xf]
    %v880 = vld [vmem:[#allocation7 + $0x20] sm:$0xf]
    %v881 = vld [vmem:[#allocation7 + $0x24] sm:$0xf]
    %v882 = vld [vmem:[#allocation7 + $0x28] sm:$0xf]
    %v883 = vld [vmem:[#allocation7 + $0x2c] sm:$0xf]
    %v884 = vld [vmem:[#allocation7 + $0x30] sm:$0xf]
    %v885 = vld [vmem:[#allocation7 + $0x34] sm:$0xf]
    %v886 = vld [vmem:[#allocation7 + $0x38] sm:$0xf]
    %v887 = vld [vmem:[#allocation7 + $0x3c] sm:$0xf]
    %v888 = vld [vmem:[#allocation7 + $0x40] sm:$0xf]
    %v889 = vld [vmem:[#allocation7 + $0x44] sm:$0xf]
    %v890 = vld [vmem:[#allocation7 + $0x48] sm:$0xf]
    %v891 = vld [vmem:[#allocation7 + $0x4c] sm:$0xf]
    %v892 = vld [vmem:[#allocation7 + $0x50] sm:$0xf]
    %v893 = vld [vmem:[#allocation7 + $0x54] sm:$0xf]
    %v894 = vld [vmem:[#allocation7 + $0x58] sm:$0xf]
    %v895 = vld [vmem:[#allocation7 + $0x5c] sm:$0xf]
    %v896 = vld [vmem:[#allocation7 + $0x60] sm:$0xf]
    %v897 = vld [vmem:[#allocation7 + $0x64] sm:$0xf]
    %v898 = vld [vmem:[#allocation7 + $0x68] sm:$0xf]
    %v899 = vld [vmem:[#allocation7 + $0x6c] sm:$0xf]
    %v900 = vld [vmem:[#allocation7 + $0x70] sm:$0xf]
    %v901 = vld [vmem:[#allocation7 + $0x74] sm:$0xf]
    %v902 = vld [vmem:[#allocation7 + $0x78] sm:$0xf]
    %v903 = vld [vmem:[#allocation7 + $0x7c] sm:$0xf]
    %v904 = vld [vmem:[#allocation7 + $0x80] sm:$0xf]
    %v905 = vld [vmem:[#allocation7 + $0x84] sm:$0xf]
    %v906 = vld [vmem:[#allocation7 + $0x88] sm:$0xf]
    %v907 = vld [vmem:[#allocation7 + $0x8c] sm:$0xf]
    %v908 = vld [vmem:[#allocation7 + $0x90] sm:$0xf]
    %v909 = vld [vmem:[#allocation7 + $0x94] sm:$0xf]
    %v910 = vld [vmem:[#allocation7 + $0x98] sm:$0xf]
    %v911 = vld [vmem:[#allocation7 + $0x9c] sm:$0xf]
    %v912 = vld [vmem:[#allocation7 + $0xa0] sm:$0xf]
    %v913 = vld [vmem:[#allocation7 + $0xa4] sm:$0xf]
    %v914 = vld [vmem:[#allocation7 + $0xa8] sm:$0xf]
    %v915 = vld [vmem:[#allocation7 + $0xac] sm:$0xf]
    %v916 = vld [vmem:[#allocation7 + $0xb0] sm:$0xf]
    %v917 = vld [vmem:[#allocation7 + $0xb4] sm:$0xf]
    %v918 = vld [vmem:[#allocation7 + $0xb8] sm:$0xf]
    %v919 = vld [vmem:[#allocation7 + $0xbc] sm:$0xf]
    %v968 = vunpack.c.l.b16 %v872
    %v969 = vunpack.c.l.b16 %v873
    %v970 = vunpack.c.l.b16 %v874
    %v971 = vunpack.c.l.b16 %v875
    %v972 = vunpack.c.l.b16 %v876
    %v973 = vunpack.c.l.b16 %v877
    %v974 = vunpack.c.l.b16 %v878
    %v975 = vunpack.c.l.b16 %v879
    %v976 = vunpack.c.l.b16 %v880
    %v977 = vunpack.c.l.b16 %v881
    %v978 = vunpack.c.l.b16 %v882
    %v979 = vunpack.c.l.b16 %v883
    %v980 = vunpack.c.l.b16 %v884
    %v981 = vunpack.c.l.b16 %v885
    %v982 = vunpack.c.l.b16 %v886
    %v983 = vunpack.c.l.b16 %v887
    %v984 = vunpack.c.l.b16 %v888
    %v985 = vunpack.c.l.b16 %v889
    %v986 = vunpack.c.l.b16 %v890
    %v987 = vunpack.c.l.b16 %v891
    %v988 = vunpack.c.l.b16 %v892
    %v989 = vunpack.c.l.b16 %v893
    %v990 = vunpack.c.l.b16 %v894
    %v991 = vunpack.c.l.b16 %v895
    %v992 = vunpack.c.l.b16 %v896
    %v993 = vunpack.c.l.b16 %v897
    %v994 = vunpack.c.l.b16 %v898
    %v995 = vunpack.c.l.b16 %v899
    %v996 = vunpack.c.l.b16 %v900
    %v997 = vunpack.c.l.b16 %v901
    %v998 = vunpack.c.l.b16 %v902
    %v999 = vunpack.c.l.b16 %v903
    %v1000 = vunpack.c.l.b16 %v904
    %v1001 = vunpack.c.l.b16 %v905
    %v1002 = vunpack.c.l.b16 %v906
    %v1003 = vunpack.c.l.b16 %v907
    %v1004 = vunpack.c.l.b16 %v908
    %v1005 = vunpack.c.l.b16 %v909
    %v1006 = vunpack.c.l.b16 %v910
    %v1007 = vunpack.c.l.b16 %v911
    %v1008 = vunpack.c.l.b16 %v912
    %v1009 = vunpack.c.l.b16 %v913
    %v1010 = vunpack.c.l.b16 %v914
    %v1011 = vunpack.c.l.b16 %v915
    %v1012 = vunpack.c.l.b16 %v916
    %v1013 = vunpack.c.l.b16 %v917
    %v1014 = vunpack.c.l.b16 %v918
    %v1015 = vunpack.c.l.b16 %v919
    %v1016 = vpack.c.b16 %v969, %v968
    %v1017 = vpack.c.b16 %v971, %v970
    %v1018 = vpack.c.b16 %v973, %v972
    %v1019 = vpack.c.b16 %v975, %v974
    %v1020 = vpack.c.b16 %v977, %v976
    %v1021 = vpack.c.b16 %v979, %v978
    %v1022 = vpack.c.b16 %v981, %v980
    %v1023 = vpack.c.b16 %v983, %v982
    %v1024 = vpack.c.b16 %v985, %v984
    %v1025 = vpack.c.b16 %v987, %v986
    %v1026 = vpack.c.b16 %v989, %v988
    %v1027 = vpack.c.b16 %v991, %v990
    %v1028 = vpack.c.b16 %v993, %v992
    %v1029 = vpack.c.b16 %v995, %v994
    %v1030 = vpack.c.b16 %v997, %v996
    %v1031 = vpack.c.b16 %v999, %v998
    %v1032 = vpack.c.b16 %v1001, %v1000
    %v1033 = vpack.c.b16 %v1003, %v1002
    %v1034 = vpack.c.b16 %v1005, %v1004
    %v1035 = vpack.c.b16 %v1007, %v1006
    %v1036 = vpack.c.b16 %v1009, %v1008
    %v1037 = vpack.c.b16 %v1011, %v1010
    %v1038 = vpack.c.b16 %v1013, %v1012
    %v1039 = vpack.c.b16 %v1015, %v1014
    %1064 = vmatprep.subr.bf16.mxu0 0
    %1065 = vmatpush1.bf16.msra.mxu0 %v1023
    %1066 = vmatprep.subr.bf16.mxu0 0
    %1067 = vmatpush1.bf16.msra.mxu0 %v1022
    %1068 = vmatprep.subr.bf16.mxu0 0
    %1069 = vmatpush1.bf16.msra.mxu0 %v1021
    %1070 = vmatprep.subr.bf16.mxu0 0
    %1071 = vmatpush1.bf16.msra.mxu0 %v1020
    %1072 = vmatprep.subr.bf16.mxu0 0
    %1073 = vmatpush1.bf16.msra.mxu0 %v1019
    %1074 = vmatprep.subr.bf16.mxu0 0
    %1075 = vmatpush1.bf16.msra.mxu0 %v1018
    %1076 = vmatprep.subr.bf16.mxu0 0
    %1077 = vmatpush1.bf16.msra.mxu0 %v1017
    %1078 = vmatprep.subr.bf16.mxu0 0
    %1079 = vmatpush1.bf16.msra.mxu0 %v1016
    %1080 = vmatprep.subr.bf16.mxu0 0
    %1081 = vmatpush2.bf16.msra.mxu0 %v1031
    %1082 = vmatprep.subr.bf16.mxu0 0
    %1083 = vmatpush2.bf16.msra.mxu0 %v1030
    %1084 = vmatprep.subr.bf16.mxu0 0
    %1085 = vmatpush2.bf16.msra.mxu0 %v1029
    %1086 = vmatprep.subr.bf16.mxu0 0
    %1087 = vmatpush2.bf16.msra.mxu0 %v1028
    %1088 = vmatprep.subr.bf16.mxu0 0
    %1089 = vmatpush2.bf16.msra.mxu0 %v1027
    %1090 = vmatprep.subr.bf16.mxu0 0
    %1091 = vmatpush2.bf16.msra.mxu0 %v1026
    %1092 = vmatprep.subr.bf16.mxu0 0
    %1093 = vmatpush2.bf16.msra.mxu0 %v1025
    %1094 = vmatprep.subr.bf16.mxu0 0
    %1095 = vmatpush2.bf16.msra.mxu0 %v1024
    %1096 = vmatprep.mubr.bf16.mxu0 %v870
    %1097 = vmatmul.mubr.bf16.gmra.mxu0 %v869
    %v1098 = vpop.f32.mrf.mxu0
    %v1099 = vadd.f32 0.0, %v1098
    %v1100 = vpop.f32.mrf.mxu0
    %v1101 = vpop.f32.mrf.mxu0
    %v1102 = vpop.f32.mrf.mxu0
    %1103 = vdwg.mxu0
    %1104 = vmatprep.subr.bf16.mxu0 0
    %1105 = vmatpush1.bf16.msra.mxu0 %v1039
    %1106 = vmatprep.subr.bf16.mxu0 0
    %1107 = vmatpush1.bf16.msra.mxu0 %v1038
    %1108 = vmatprep.subr.bf16.mxu0 0
    %1109 = vmatpush1.bf16.msra.mxu0 %v1037
    %1110 = vmatprep.subr.bf16.mxu0 0
    %1111 = vmatpush1.bf16.msra.mxu0 %v1036
    %1112 = vmatprep.subr.bf16.mxu0 0
    %1113 = vmatpush1.bf16.msra.mxu0 %v1035
    %1114 = vmatprep.subr.bf16.mxu0 0
    %1115 = vmatpush1.bf16.msra.mxu0 %v1034
    %1116 = vmatprep.subr.bf16.mxu0 0
    %1117 = vmatpush1.bf16.msra.mxu0 %v1033
    %1118 = vmatprep.subr.bf16.mxu0 0
    %1119 = vmatpush1.bf16.msra.mxu0 %v1032
    %1120 = vmatprep.subr.bf16.mxu0 0
    %1121 = vmatpush2.bf16.msra.mxu0 0
    %1122 = vmatprep.subr.bf16.mxu0 0
    %1123 = vmatpush2.bf16.msra.mxu0 0
    %1124 = vmatprep.subr.bf16.mxu0 0
    %1125 = vmatpush2.bf16.msra.mxu0 0
    %1126 = vmatprep.subr.bf16.mxu0 0
    %1127 = vmatpush2.bf16.msra.mxu0 0
    %1128 = vmatprep.subr.bf16.mxu0 0
    %1129 = vmatpush2.bf16.msra.mxu0 0
    %1130 = vmatprep.subr.bf16.mxu0 0
    %1131 = vmatpush2.bf16.msra.mxu0 0
    %1132 = vmatprep.subr.bf16.mxu0 0
    %1133 = vmatpush2.bf16.msra.mxu0 0
    %1134 = vmatprep.subr.bf16.mxu0 0
    %1135 = vmatpush2.bf16.msra.mxu0 0
    %1136 = vmatprep.mubr.bf16.mxu0 0
    %1137 = vmatmul.mubr.bf16.gmra.mxu0 %v871
    %v1138 = vpop.f32.mrf.mxu0
    %v1139 = vadd.f32 %v1099, %v1138
    %v1140 = vpop.f32.mrf.mxu0
    %v1141 = vpop.f32.mrf.mxu0
    %v1142 = vpop.f32.mrf.mxu0
    %1143 = vdwg.mxu0
    %vm1144 = vcmask 7168
    %1145 = vst.msk [vmem:[%s5] sm:$0xff] %vm1144, %v1139
    // Predicated region
    $region38: #{critic_forward.1} parent=1 // pred_check
      _
    $region39: #{critic_forward.1} parent=1 // pred_check_branch
      %1147 = sbr.rel (0) target = $region41
    $region40: #{critic_forward.1} parent=1 // pred_region
      _
    $region41: #{critic_forward.1} parent=1 // pred_fallthru
      _
    // Predicated region
    $region42: #{critic_forward.1} parent=1 // pred_check
      _
    $region43: #{critic_forward.1} parent=1 // pred_check_branch
      %1149 = sbr.rel (0) target = $region45
    $region44: #{critic_forward.1} parent=1 // pred_region
      _
    $region45: #{critic_forward.1} parent=1 // pred_fallthru
      _
    %1150 = vsyncpa [#allocation3], 1
    %1151 = vsyncpa [#allocation5], 1
    %1152 = vsyncpa [#allocation8], 1

</llo_original>
